<compile_context>
chip_gen: v7x
topology: tpu7x:2x2x1
jax: 0.10.0
libtpu: 0.0.40
codegen_flags: <defaults>
</compile_context>

<pallas_src>
import functools

import jax
import jax.numpy as jnp
from jax.experimental import pallas as pl
from jax.experimental.pallas import tpu as pltpu


# ----------------------------- small helpers ---------------------------------

def _round_up(x, m):
    return (x + m - 1) // m * m


def _default_min_steps():
    # ~4 grid steps on 2-TC chips (v7x) so the "parallel" row axis can shard across cores;
    # 2 on single-TC v5e/v6e (bigger tiles just amortize the per-step pipeline overhead).
    try:
        if getattr(jax.devices()[0], "num_cores", 1) >= 2:
            return 4
    except Exception:
        pass
    return 2


def _choose_tm(n_rows, tm_max=2048, min_steps=None):
    # VMEM is not the constraint here (weights are tiny, x/out tiles are narrow), so grow
    # the row tile aggressively; per-grid-step overhead (~0.35-0.6 us) is the main cost.
    if min_steps is None:
        min_steps = _default_min_steps()
    tm = _round_up(max(pl.cdiv(n_rows, min_steps), 1), 8)
    return max(8, min(tm_max, tm))


# ----------------------------- Pallas kernel ---------------------------------

def _color_net_kernel(x_ref, w1_ref, b1_ref, w2_ref, w3d_ref, b3d_ref,
                      w3c_ref, wc1_ref, bc1_ref, outd_ref, outc_ref,
                      *, he, hd, cdt):
    f32 = jnp.float32
    x = x_ref[...]                      # (tm, xdim) packed [inpf | inf | inp | dir | 0-pad]

    # 1) fused first layers over packed x:
    #      lanes [0:he)            encoder L0 preact                    (ReLU'd)
    #      lanes [he:he+hd)        decoder L0 "inp" part + folded bias  (linear passthrough)
    #      lanes [he+hd:he+hd+hc)  color   L0 "dir" part + folded bias  (linear passthrough)
    t1 = jnp.dot(x, w1_ref[...], preferred_element_type=f32) + b1_ref[...]
    lanes1 = jax.lax.broadcasted_iota(jnp.int32, t1.shape, 1)
    h1 = jnp.where(lanes1 < he, jnp.maximum(t1, 0.0), t1).astype(cdt)

    # 2) encoder L1 folded into decoder L0 (Wed) + identity passthrough rows:
    #      lanes [0:hd)      decoder L0 preact (ReLU'd -> h_d)
    #      lanes [hd:hd+hc)  color L0 partial preact (linear passthrough)
    t2 = jnp.dot(h1, w2_ref[...], preferred_element_type=f32)
    lanes2 = jax.lax.broadcasted_iota(jnp.int32, t2.shape, 1)
    h2 = jnp.where(lanes2 < hd, jnp.maximum(t2, 0.0), t2).astype(cdt)

    # 3a) decoder L1 -> outd (exact-width f32 store; the passthrough rows of w3d are zero)
    outd = jnp.dot(h2, w3d_ref[...], preferred_element_type=f32) + b3d_ref[...]
    outd_ref[...] = outd.astype(outd_ref.dtype)

    # 3b) color L0 via fold (Wdc) + identity passthrough of the direction part, then ReLU
    h_c = jnp.maximum(jnp.dot(h2, w3c_ref[...], preferred_element_type=f32), 0.0).astype(cdt)

    # 4) color L1 + final ReLU -> outc (padded to 8 lanes, pad lanes are exact zeros)
    outc = jnp.maximum(
        jnp.dot(h_c, wc1_ref[...], preferred_element_type=f32) + bc1_ref[...], 0.0)
    outc_ref[...] = outc.astype(outc_ref.dtype)


# ----------------------------- parameter prep --------------------------------

def _prepare_kernel_params(params, pfin, fin, pin, view, inter_weight,
                           compute_dtype=jnp.bfloat16, x_dtype=None):
    """Fold, fuse and zero-pad the logical parameters into 5 kernel matmul operands."""
    f32 = jnp.float32
    if x_dtype is None:
        x_dtype = compute_dtype

    we0, be0 = params["we0"].astype(f32), params["be0"].astype(f32)
    we1, be1 = params["we1"].astype(f32), params["be1"].astype(f32)
    wd0, bd0 = params["wd0"].astype(f32), params["bd0"].astype(f32)
    wd1, bd1 = params["wd1"].astype(f32), params["bd1"].astype(f32)
    wc0, bc0 = params["wc0"].astype(f32), params["bc0"].astype(f32)
    wc1, bc1 = params["wc1"].astype(f32), params["bc1"].astype(f32)

    he, enc = we1.shape
    hd, dec = wd1.shape
    hc, cout = wc1.shape

    din = pfin + fin + pin + view
    xdim = _round_up(din, 8)
    w1n = _round_up(he + hd + hc, 128)      # lane-dense width of the fused first layer
    cpad = _round_up(cout, 8)
    iw = jnp.asarray(inter_weight, f32)

    # exact algebraic folds (no ReLU between the folded Linear pairs)
    wed = we1 @ wd0[:enc]                   # encoder L1 -> decoder L0
    bd0p = bd0 + be1 @ wd0[:enc]
    wdc = wd1 @ wc0[:dec]                   # decoder L1 -> color L0
    bc0p = bc0 + bd1 @ wc0[:dec]

    # W1 / B1: fused first layers over packed x = [inpf | inf | inp | dir | 0-pad];
    # inter_weight is folded into the inpf rows of the encoder block.
    w1 = jnp.zeros((xdim, w1n), f32)
    w1 = w1.at[:pfin, 0:he].set(we0[:pfin] * iw)
    w1 = w1.at[pfin:pfin + fin, 0:he].set(we0[pfin:])
    w1 = w1.at[pfin + fin:pfin + fin + pin, he:he + hd].set(wd0[enc:])
    w1 = w1.at[pfin + fin + pin:din, he + hd:he + hd + hc].set(wc0[dec:])
    b1 = jnp.zeros((1, w1n), f32)
    b1 = b1.at[:, 0:he].set(be0)
    b1 = b1.at[:, he:he + hd].set(bd0p)
    b1 = b1.at[:, he + hd:he + hd + hc].set(bc0p)

    # W2: folded encoder->decoder weight + identity rows routing the linear passthroughs.
    w2 = jnp.zeros((w1n, hd + hc), f32)
    w2 = w2.at[0:he, 0:hd].set(wed)
    w2 = w2.at[he:he + hd, 0:hd].set(jnp.eye(hd, dtype=f32))
    w2 = w2.at[he + hd:he + hd + hc, hd:hd + hc].set(jnp.eye(hc, dtype=f32))

    # W3d / b3d: decoder second layer -> outd (passthrough rows zeroed).
    w3d = jnp.zeros((hd + hc, dec), f32).at[0:hd, :].set(wd1)
    b3d = bd1

    # W3c: folded decoder->color weight + identity passthrough of the direction part.
    w3c = jnp.zeros((hd + hc, hc), f32)
    w3c = w3c.at[0:hd, :].set(wdc)
    w3c = w3c.at[hd:hd + hc, :].set(jnp.eye(hc, dtype=f32))

    # Wc1 / bc1: color second layer, padded to 8 output lanes (pad lanes stay exactly 0).
    wc1p = jnp.zeros((hc, cpad), f32).at[:, :cout].set(wc1)
    bc1p = jnp.zeros((1, cpad), f32).at[:, :cout].set(bc1)

    return dict(
        w1=w1.astype(x_dtype), b1=b1,
        w2=w2.astype(compute_dtype),
        w3d=w3d.astype(compute_dtype), b3d=b3d,
        w3c=w3c.astype(compute_dtype),
        wc1=wc1p.astype(compute_dtype), bc1=bc1p,
        meta=dict(he=he, hd=hd, dec=dec, cout=cout, cpad=cpad, xdim=xdim),
    )


# ----------------------------- host wrapper ----------------------------------

def color_net_forward(params, inp, inf, inpf, direction, inter_weight=1.0,
                      tm=None, compute_dtype=jnp.bfloat16, x_dtype=None):
    """Fused Color_net forward pass.

    inp: (N, pin), inf: (N, fin), inpf: (N, pfin), direction: (N, view)
    Returns (outd (N, dec), outc (N, 3)) in float32.  compute_dtype controls the MXU
    operand dtype (bf16 default, f32 accumulation); x_dtype=jnp.float32 keeps the raw
    coordinate/direction stream un-quantized.
    """
    N = inp.shape[0]
    pin, fin, pfin, view = inp.shape[1], inf.shape[1], inpf.shape[1], direction.shape[1]
    if x_dtype is None:
        x_dtype = compute_dtype

    kp = _prepare_kernel_params(params, pfin, fin, pin, view, inter_weight,
                                compute_dtype=compute_dtype, x_dtype=x_dtype)
    meta = kp["meta"]
    he, hd, dec, cout, cpad, xdim = (meta["he"], meta["hd"], meta["dec"],
                                     meta["cout"], meta["cpad"], meta["xdim"])

    # Single packed input stream [inpf | inf | inp | direction | zero-pad]; cast BEFORE the
    # concat/pad so the wrapper-side round trip runs at the compute width.
    x = jnp.concatenate([inpf.astype(x_dtype), inf.astype(x_dtype),
                         inp.astype(x_dtype), direction.astype(x_dtype)], axis=1)
    x = jnp.pad(x, ((0, 0), (0, xdim - x.shape[1])))

    if tm is None:
        tm = _choose_tm(N)
    assert tm % 8 == 0, "row tile must be a multiple of 8 (sublane constraint)"
    Np = _round_up(N, tm)
    if Np != N:
        x = jnp.pad(x, ((0, Np - N), (0, 0)))

    weight_names = ("w1", "b1", "w2", "w3d", "b3d", "w3c", "wc1", "bc1")
    weights = [kp[n] for n in weight_names]

    # x is the only per-row stream; all weights/biases use constant index_maps so they are
    # DMA'd once and stay resident in VMEM across the whole grid.
    in_specs = [pl.BlockSpec((tm, xdim), lambda i: (i, 0))] + [
        pl.BlockSpec(w.shape, lambda i: (0, 0)) for w in weights]
    out_specs = [pl.BlockSpec((tm, dec), lambda i: (i, 0)),
                 pl.BlockSpec((tm, cpad), lambda i: (i, 0))]

    kernel = functools.partial(_color_net_kernel, he=he, hd=hd, cdt=compute_dtype)
    outd, outc = pl.pallas_call(
        kernel,
        out_shape=(jax.ShapeDtypeStruct((Np, dec), jnp.float32),
                   jax.ShapeDtypeStruct((Np, cpad), jnp.float32)),
        grid_spec=pltpu.PrefetchScalarGridSpec(
            num_scalar_prefetch=0,
            grid=(Np // tm,),
            in_specs=in_specs,
            out_specs=out_specs,
        ),
        compiler_params=pltpu.CompilerParams(
            dimension_semantics=("parallel",),
        ),
    )(x, *weights)

    return outd[:N], outc[:N, :cout]


# ----------------------------- parameter init --------------------------------

def _xavier_linear(key, fan_in, fan_out):
    # xavier-uniform weight stored transposed as (in, out); zero bias
    limit = (6.0 / (fan_in + fan_out)) ** 0.5
    w = jax.random.uniform(key, (fan_in, fan_out), jnp.float32, -limit, limit)
    b = jnp.zeros((1, fan_out), jnp.float32)
    return w, b


def init_color_net_params(key, fin_dim, pin_dim, view_dim, pfin_dim,
                          enc_dim, dec_dim, en_hidden, de_hidden, cde_hidden):
    ks = jax.random.split(key, 6)
    # encoder: Linear(pfin+fin -> en_hidden) -> ReLU -> Linear(en_hidden -> enc_dim)
    we0, be0 = _xavier_linear(ks[0], pfin_dim + fin_dim, en_hidden)
    we1, be1 = _xavier_linear(ks[1], en_hidden, enc_dim)
    # decoder: Linear(enc+pin -> de_hidden) -> ReLU -> Linear(de_hidden -> dec_dim)
    wd0, bd0 = _xavier_linear(ks[2], enc_dim + pin_dim, de_hidden)
    wd1, bd1 = _xavier_linear(ks[3], de_hidden, dec_dim)
    # color_decoder: Linear(dec+view -> cde_hidden) -> ReLU -> Linear(cde_hidden -> 3) -> ReLU
    wc0, bc0 = _xavier_linear(ks[4], dec_dim + view_dim, cde_hidden)
    wc1, bc1 = _xavier_linear(ks[5], cde_hidden, 3)
    return dict(we0=we0, be0=be0, we1=we1, be1=be1,
                wd0=wd0, bd0=bd0, wd1=wd1, bd1=bd1,
                wc0=wc0, bc0=bc0, wc1=wc1, bc1=bc1)


# ----------------------------- reference (plain JAX) --------------------------

def color_net_reference(params, inp, inf, inpf, direction, inter_weight=1.0):
    inpf = inpf * inter_weight
    inx = jnp.concatenate([inpf, inf], axis=1)
    h = jnp.maximum(inx @ params["we0"] + params["be0"], 0.0)
    oute = h @ params["we1"] + params["be1"]
    xd = jnp.concatenate([oute, inp], axis=1)
    h = jnp.maximum(xd @ params["wd0"] + params["bd0"], 0.0)
    outd = h @ params["wd1"] + params["bd1"]
    xc = jnp.concatenate([outd, direction], axis=1)
    h = jnp.maximum(xc @ params["wc0"] + params["bc0"], 0.0)
    outc = jnp.maximum(h @ params["wc1"] + params["bc1"], 0.0)
    return outd, outc


# ----------------------------------- main -------------------------------------

if __name__ == "__main__":
    # small, module-consistent shapes
    N = 16           # number of points / rows
    fin_dim = 8      # inf feature dim
    pfin_dim = 8     # inpf feature dim
    pin_dim = 3      # inp (xyz) dim
    view_dim = 3     # direction dim
    enc_dim = 32
    dec_dim = 32
    en_hidden = 32   # en_dims = [32]
    de_hidden = 32   # de_dims = [32]
    cde_hidden = 32  # cde_dims = [32]

    key = jax.random.PRNGKey(0)
    k_p, k_f, k_pf, k_d, k_w = jax.random.split(key, 5)

    inp = jax.random.normal(k_p, (N, pin_dim), jnp.float32)
    inf = jax.random.normal(k_f, (N, fin_dim), jnp.float32)
    inpf = jax.random.normal(k_pf, (N, pfin_dim), jnp.float32)
    direction = jax.random.normal(k_d, (N, view_dim), jnp.float32)

    params = init_color_net_params(
        k_w, fin_dim, pin_dim, view_dim, pfin_dim,
        enc_dim, dec_dim, en_hidden, de_hidden, cde_hidden,
    )

    # --- exactness check: f32 operands (folds exact up to reassociation), inter_weight fold ---
    outd, outc = color_net_forward(params, inp, inf, inpf, direction,
                                   inter_weight=0.5, compute_dtype=jnp.float32)
    outd = jax.block_until_ready(outd)
    outc = jax.block_until_ready(outc)
    ref_d, ref_c = color_net_reference(params, inp, inf, inpf, direction, inter_weight=0.5)
    assert outd.shape == (N, dec_dim) and outc.shape == (N, 3)
    assert jnp.allclose(outd, ref_d, atol=1e-3, rtol=1e-3)
    assert jnp.allclose(outc, ref_c, atol=1e-3, rtol=1e-3)

    # --- default bf16 MXU-operand path, non-multiple-of-tile N ---
    N2 = 100
    k2 = jax.random.split(key, 4)
    inp2 = jax.random.normal(k2[0], (N2, pin_dim), jnp.float32)
    inf2 = jax.random.normal(k2[1], (N2, fin_dim), jnp.float32)
    inpf2 = jax.random.normal(k2[2], (N2, pfin_dim), jnp.float32)
    dir2 = jax.random.normal(k2[3], (N2, view_dim), jnp.float32)
    outd2, outc2 = color_net_forward(params, inp2, inf2, inpf2, dir2, inter_weight=1.0)
    outd2 = jax.block_until_ready(outd2)
    outc2 = jax.block_until_ready(outc2)
    rd2, rc2 = color_net_reference(params, inp2, inf2, inpf2, dir2, inter_weight=1.0)
    assert outd2.shape == (N2, dec_dim) and outc2.shape == (N2, 3)
    assert jnp.allclose(outd2, rd2, atol=2e-1, rtol=1e-1)
    assert jnp.allclose(outc2, rc2, atol=2e-1, rtol=1e-1)

    # --- bf16 weights/activations with f32 packed inputs (coordinate-fidelity option) ---
    outd3, outc3 = color_net_forward(params, inp2, inf2, inpf2, dir2,
                                     inter_weight=1.0, x_dtype=jnp.float32)
    outd3 = jax.block_until_ready(outd3)
    outc3 = jax.block_until_ready(outc3)
    assert jnp.allclose(outd3, rd2, atol=2e-1, rtol=1e-1)
    assert jnp.allclose(outc3, rc2, atol=2e-1, rtol=1e-1)

    print("KERNEL_OK")
</pallas_src>

<mosaic_0001>
module attributes {stable_mosaic.version = 11 : i64} {
  func.func @_color_net_kernel(%arg0: i32, %arg1: memref<8x24xf32, #tpu.memory_space<vmem>>, %arg2: memref<24x128xf32, #tpu.memory_space<vmem>>, %arg3: memref<1x128xf32, #tpu.memory_space<vmem>>, %arg4: memref<128x64xf32, #tpu.memory_space<vmem>>, %arg5: memref<64x32xf32, #tpu.memory_space<vmem>>, %arg6: memref<1x32xf32, #tpu.memory_space<vmem>>, %arg7: memref<64x32xf32, #tpu.memory_space<vmem>>, %arg8: memref<32x8xf32, #tpu.memory_space<vmem>>, %arg9: memref<1x8xf32, #tpu.memory_space<vmem>>, %arg10: memref<8x32xf32, #tpu.memory_space<vmem>>, %arg11: memref<8x8xf32, #tpu.memory_space<vmem>>) attributes {dimension_semantics = [#tpu.dimension_semantics<parallel>], iteration_bounds = array<i64: 2>, scalar_prefetch = 0 : i64, scratch_operands = 0 : i64, tpu.core_type = #tpu.core_type<tc>, window_params = [{transform_indices = @transform_0, window_bounds = array<i64: 8, 24>}, {pipeline_mode = #tpu.pipeline_mode<synchronous>, transform_indices = @transform_1, window_bounds = array<i64: 24, 128>}, {pipeline_mode = #tpu.pipeline_mode<synchronous>, transform_indices = @transform_2, window_bounds = array<i64: 1, 128>}, {pipeline_mode = #tpu.pipeline_mode<synchronous>, transform_indices = @transform_3, window_bounds = array<i64: 128, 64>}, {pipeline_mode = #tpu.pipeline_mode<synchronous>, transform_indices = @transform_4, window_bounds = array<i64: 64, 32>}, {pipeline_mode = #tpu.pipeline_mode<synchronous>, transform_indices = @transform_5, window_bounds = array<i64: 1, 32>}, {pipeline_mode = #tpu.pipeline_mode<synchronous>, transform_indices = @transform_6, window_bounds = array<i64: 64, 32>}, {pipeline_mode = #tpu.pipeline_mode<synchronous>, transform_indices = @transform_7, window_bounds = array<i64: 32, 8>}, {pipeline_mode = #tpu.pipeline_mode<synchronous>, transform_indices = @transform_8, window_bounds = array<i64: 1, 8>}, {transform_indices = @transform_9, window_bounds = array<i64: 8, 32>}, {transform_indices = @transform_10, window_bounds = array<i64: 8, 8>}]} {
    %c0 = arith.constant 0 : index
    %c0_0 = arith.constant 0 : index
    %0 = vector.load %arg1[%c0, %c0_0] : memref<8x24xf32, #tpu.memory_space<vmem>>, vector<8x24xf32>
    %c0_1 = arith.constant 0 : index
    %c0_2 = arith.constant 0 : index
    %1 = vector.load %arg2[%c0_1, %c0_2] : memref<24x128xf32, #tpu.memory_space<vmem>>, vector<24x128xf32>
    %cst = arith.constant dense<0.000000e+00> : vector<8x128xf32>
    %2 = tpu.matmul %0, %1, %cst {dimension_numbers = #tpu.dot_dimension_numbers<[1], [0], [0], [1], [0, 0, 1, 1], [], []>} : vector<8x24xf32>, vector<24x128xf32>, vector<8x128xf32> -> vector<8x128xf32>
    %c0_3 = arith.constant 0 : index
    %c0_4 = arith.constant 0 : index
    %3 = vector.load %arg3[%c0_3, %c0_4] : memref<1x128xf32, #tpu.memory_space<vmem>>, vector<1x128xf32>
    %4 = vector.broadcast %3 : vector<1x128xf32> to vector<8x128xf32>
    %5 = arith.addf %2, %4 : vector<8x128xf32>
    %6 = tpu.iota {dimensions = array<i32: 1>} : vector<8x128xi32>
    %c32_i32 = arith.constant 32 : i32
    %7 = vector.broadcast %c32_i32 : i32 to vector<8x128xi32>
    %8 = arith.cmpi slt, %6, %7 : vector<8x128xi32>
    %cst_5 = arith.constant 0.000000e+00 : f32
    %9 = vector.broadcast %cst_5 : f32 to vector<8x128xf32>
    %10 = arith.maximumf %5, %9 : vector<8x128xf32>
    %11 = arith.select %8, %10, %5 : vector<8x128xi1>, vector<8x128xf32>
    %c0_6 = arith.constant 0 : index
    %c0_7 = arith.constant 0 : index
    %12 = vector.load %arg4[%c0_6, %c0_7] : memref<128x64xf32, #tpu.memory_space<vmem>>, vector<128x64xf32>
    %cst_8 = arith.constant dense<0.000000e+00> : vector<8x64xf32>
    %13 = tpu.matmul %11, %12, %cst_8 {dimension_numbers = #tpu.dot_dimension_numbers<[1], [0], [0], [1], [0, 0, 1, 1], [], []>} : vector<8x128xf32>, vector<128x64xf32>, vector<8x64xf32> -> vector<8x64xf32>
    %14 = tpu.iota {dimensions = array<i32: 1>} : vector<8x64xi32>
    %c32_i32_9 = arith.constant 32 : i32
    %15 = vector.broadcast %c32_i32_9 : i32 to vector<8x64xi32>
    %16 = arith.cmpi slt, %14, %15 : vector<8x64xi32>
    %cst_10 = arith.constant 0.000000e+00 : f32
    %17 = vector.broadcast %cst_10 : f32 to vector<8x64xf32>
    %18 = arith.maximumf %13, %17 : vector<8x64xf32>
    %19 = arith.select %16, %18, %13 : vector<8x64xi1>, vector<8x64xf32>
    %c0_11 = arith.constant 0 : index
    %c0_12 = arith.constant 0 : index
    %20 = vector.load %arg5[%c0_11, %c0_12] : memref<64x32xf32, #tpu.memory_space<vmem>>, vector<64x32xf32>
    %cst_13 = arith.constant dense<0.000000e+00> : vector<8x32xf32>
    %21 = tpu.matmul %19, %20, %cst_13 {dimension_numbers = #tpu.dot_dimension_numbers<[1], [0], [0], [1], [0, 0, 1, 1], [], []>} : vector<8x64xf32>, vector<64x32xf32>, vector<8x32xf32> -> vector<8x32xf32>
    %c0_14 = arith.constant 0 : index
    %c0_15 = arith.constant 0 : index
    %22 = vector.load %arg6[%c0_14, %c0_15] : memref<1x32xf32, #tpu.memory_space<vmem>>, vector<1x32xf32>
    %23 = vector.broadcast %22 : vector<1x32xf32> to vector<8x32xf32>
    %24 = arith.addf %21, %23 : vector<8x32xf32>
    %c0_16 = arith.constant 0 : index
    %c0_17 = arith.constant 0 : index
    %25 = vector.load %arg10[%c0_16, %c0_17] : memref<8x32xf32, #tpu.memory_space<vmem>>, vector<8x32xf32>
    tpu.vector_store %arg10[%c0_16, %c0_17], %24 {strides = array<i32>} : memref<8x32xf32, #tpu.memory_space<vmem>>, vector<8x32xf32>,
    %c0_18 = arith.constant 0 : index
    %c0_19 = arith.constant 0 : index
    %26 = vector.load %arg7[%c0_18, %c0_19] : memref<64x32xf32, #tpu.memory_space<vmem>>, vector<64x32xf32>
    %cst_20 = arith.constant dense<0.000000e+00> : vector<8x32xf32>
    %27 = tpu.matmul %19, %26, %cst_20 {dimension_numbers = #tpu.dot_dimension_numbers<[1], [0], [0], [1], [0, 0, 1, 1], [], []>} : vector<8x64xf32>, vector<64x32xf32>, vector<8x32xf32> -> vector<8x32xf32>
    %cst_21 = arith.constant 0.000000e+00 : f32
    %28 = vector.broadcast %cst_21 : f32 to vector<8x32xf32>
    %29 = arith.maximumf %27, %28 : vector<8x32xf32>
    %c0_22 = arith.constant 0 : index
    %c0_23 = arith.constant 0 : index
    %30 = vector.load %arg8[%c0_22, %c0_23] : memref<32x8xf32, #tpu.memory_space<vmem>>, vector<32x8xf32>
    %cst_24 = arith.constant dense<0.000000e+00> : vector<8x8xf32>
    %31 = tpu.matmul %29, %30, %cst_24 {dimension_numbers = #tpu.dot_dimension_numbers<[1], [0], [0], [1], [0, 0, 1, 1], [], []>} : vector<8x32xf32>, vector<32x8xf32>, vector<8x8xf32> -> vector<8x8xf32>
    %c0_25 = arith.constant 0 : index
    %c0_26 = arith.constant 0 : index
    %32 = vector.load %arg9[%c0_25, %c0_26] : memref<1x8xf32, #tpu.memory_space<vmem>>, vector<1x8xf32>
    %33 = vector.broadcast %32 : vector<1x8xf32> to vector<8x8xf32>
    %34 = arith.addf %31, %33 : vector<8x8xf32>
    %cst_27 = arith.constant 0.000000e+00 : f32
    %35 = vector.broadcast %cst_27 : f32 to vector<8x8xf32>
    %36 = arith.maximumf %34, %35 : vector<8x8xf32>
    %c0_28 = arith.constant 0 : index
    %c0_29 = arith.constant 0 : index
    %37 = vector.load %arg11[%c0_28, %c0_29] : memref<8x8xf32, #tpu.memory_space<vmem>>, vector<8x8xf32>
    tpu.vector_store %arg11[%c0_28, %c0_29], %36 {strides = array<i32>} : memref<8x8xf32, #tpu.memory_space<vmem>>, vector<8x8xf32>,
    return
  }
  func.func @transform_0(%arg0: i32) -> (i32, i32) {
    %c0_i32 = arith.constant 0 : i32
    %c0_i32_0 = arith.constant 0 : i32
    return %arg0, %c0_i32 : i32, i32
  }
  func.func @transform_1(%arg0: i32) -> (i32, i32) {
    %c0_i32 = arith.constant 0 : i32
    %c0_i32_0 = arith.constant 0 : i32
    %c0_i32_1 = arith.constant 0 : i32
    return %c0_i32, %c0_i32_0 : i32, i32
  }
  func.func @transform_2(%arg0: i32) -> (i32, i32) {
    %c0_i32 = arith.constant 0 : i32
    %c0_i32_0 = arith.constant 0 : i32
    %c0_i32_1 = arith.constant 0 : i32
    return %c0_i32, %c0_i32_0 : i32, i32
  }
  func.func @transform_3(%arg0: i32) -> (i32, i32) {
    %c0_i32 = arith.constant 0 : i32
    %c0_i32_0 = arith.constant 0 : i32
    %c0_i32_1 = arith.constant 0 : i32
    return %c0_i32, %c0_i32_0 : i32, i32
  }
  func.func @transform_4(%arg0: i32) -> (i32, i32) {
    %c0_i32 = arith.constant 0 : i32
    %c0_i32_0 = arith.constant 0 : i32
    %c0_i32_1 = arith.constant 0 : i32
    return %c0_i32, %c0_i32_0 : i32, i32
  }
  func.func @transform_5(%arg0: i32) -> (i32, i32) {
    %c0_i32 = arith.constant 0 : i32
    %c0_i32_0 = arith.constant 0 : i32
    %c0_i32_1 = arith.constant 0 : i32
    return %c0_i32, %c0_i32_0 : i32, i32
  }
  func.func @transform_6(%arg0: i32) -> (i32, i32) {
    %c0_i32 = arith.constant 0 : i32
    %c0_i32_0 = arith.constant 0 : i32
    %c0_i32_1 = arith.constant 0 : i32
    return %c0_i32, %c0_i32_0 : i32, i32
  }
  func.func @transform_7(%arg0: i32) -> (i32, i32) {
    %c0_i32 = arith.constant 0 : i32
    %c0_i32_0 = arith.constant 0 : i32
    %c0_i32_1 = arith.constant 0 : i32
    return %c0_i32, %c0_i32_0 : i32, i32
  }
  func.func @transform_8(%arg0: i32) -> (i32, i32) {
    %c0_i32 = arith.constant 0 : i32
    %c0_i32_0 = arith.constant 0 : i32
    %c0_i32_1 = arith.constant 0 : i32
    return %c0_i32, %c0_i32_0 : i32, i32
  }
  func.func @transform_9(%arg0: i32) -> (i32, i32) {
    %c0_i32 = arith.constant 0 : i32
    %c0_i32_0 = arith.constant 0 : i32
    return %arg0, %c0_i32 : i32, i32
  }
  func.func @transform_10(%arg0: i32) -> (i32, i32) {
    %c0_i32 = arith.constant 0 : i32
    %c0_i32_0 = arith.constant 0 : i32
    return %arg0, %c0_i32 : i32, i32
  }
}

</mosaic_0001>

<llo_original>
// kernel: tpu_custom_call.1
$region0: #{tpu_custom_call.1}
  #allocation0 [shape = 'u32[]', space=smem, size = 0x4, offset = 0x4, fixed_abs, tag = 'smem constant byte address 0x4 - core index']
  #allocation1 [shape = 'u32[144,128]{1,0:T(1,128)}', space=vmem, size = 0x12000, scoped, tag = 'internal scratch']
  %s0 = inlined_call_operand.vmem [shape: f32[16,24], index: 0, kind: input, shape index: {}]
  %s1 = inlined_call_operand.vmem [shape: f32[24,128], index: 1, kind: input, shape index: {}]
  %s2 = inlined_call_operand.vmem [shape: f32[1,128], index: 2, kind: input, shape index: {}]
  %s3 = inlined_call_operand.vmem [shape: f32[128,64], index: 3, kind: input, shape index: {}]
  %s4 = inlined_call_operand.vmem [shape: f32[64,32], index: 4, kind: input, shape index: {}]
  %s5 = inlined_call_operand.vmem [shape: f32[1,32], index: 5, kind: input, shape index: {}]
  %s6 = inlined_call_operand.vmem [shape: f32[64,32], index: 6, kind: input, shape index: {}]
  %s7 = inlined_call_operand.vmem [shape: f32[32,8], index: 7, kind: input, shape index: {}]
  %s8 = inlined_call_operand.vmem [shape: f32[1,8], index: 8, kind: input, shape index: {}]
  %s9 = inlined_call_operand.hbm [shape: f32[16,32], index: 9, kind: output, shape index: {0}]
  %s10 = inlined_call_operand.vmem [shape: f32[16,8], index: 10, kind: output, shape index: {1}]
  %11 = xla_tuple %s9, %s10
  %s12 = sld [smem:[#allocation0]]
  $region77: #{tpu_custom_call.1} parent=0
    _
  %s14 = ssub.s32 1, %s12
  %s15 = scalar_select 0, %s14, %s12
  $region1: #{tpu_custom_call.1} parent=0
    #allocation2 [shape = 'u8[8192]{0}', space=vmem, size = 0x2000, scoped, tag = 'output window, operand 0']
    #allocation3 [shape = 's32[2]{0}', space=sflag, size = 0x8, scoped, tag = 'scoped memory for tpu_custom_call.1']
    %16 = vsyncpa [#allocation3], 0
    %s17 = scalar_lea.sflag [#allocation3], 1
    %18 = vsyncpa %s17, 0
    loop: start=0, step=1, limit=4
    $region2: #{tpu_custom_call.1} parent=1 // loop_pre_header
      _
    $region3: #{tpu_custom_call.1} parent=1 // loop_header
      %s20 = sphi 0, %s24
      %p21 = scmp.ge.s32.totalorder %s20, 4
      %s30 = sphi 0, %s32
      %s33 = sphi 0, %s30
      %s34 = sphi 0, %s33
      %s50 = sphi 0, %s34
      %s54 = sphi 0, %s54
      %s56 = sphi 0, %s54
      %s57 = sphi 0, %s56
      %s71 = sphi 0, %s57
      %s75 = sphi 0, %s75
      %s77 = sphi 0, %s75
      %s78 = sphi 0, %s77
      %s92 = sphi 0, %s78
      %s96 = sphi 0, %s96
      %s98 = sphi 0, %s96
      %s99 = sphi 0, %s98
      %s113 = sphi 0, %s99
      %s117 = sphi 0, %s117
      %s119 = sphi 0, %s117
      %s120 = sphi 0, %s119
      %s134 = sphi 0, %s120
      %s138 = sphi 0, %s138
      %s140 = sphi 0, %s138
      %s141 = sphi 0, %s140
      %s155 = sphi 0, %s141
      %s159 = sphi 0, %s159
      %s161 = sphi 0, %s159
      %s162 = sphi 0, %s161
      %s176 = sphi 0, %s162
      %s180 = sphi 0, %s180
      %s182 = sphi 0, %s180
      %s183 = sphi 0, %s182
      %s197 = sphi 0, %s183
      %s201 = sphi 0, %s201
      %s203 = sphi 0, %s201
      %s204 = sphi 0, %s203
      %s218 = sphi 0, %s204
      %s224 = sphi 0, %s226
      %s227 = sphi 0, %s224
      %s228 = sphi 0, %s227
      %s244 = sphi 0, %s228
      %s250 = sphi 0, %s252
      %s253 = sphi 0, %s250
      %s254 = sphi 0, %s253
      %s270 = sphi 0, %s254
    $region4: #{tpu_custom_call.1} parent=1 // loop_header_branch
      %23 = sbr.rel (%p21) target = $region8
    $region5: #{tpu_custom_call.1} parent=1 // loop_body
      %s25 = ssub.s32 %s20, 1
      %s26 = ssub.s32 %s20, 2
      %s27 = sadd.s32 %s20, 1
      %s28 = ssub.s32 %s20, %s27
      %p29 = scmp.eq.s32.totalorder %s28, 0
      %s31 = sadd.s32 %s30, 1
      %s32 = scalar_select %p29, %s30, %s31
      %p35 = pneg %p29
      %p36 = scmp.eq.s32.totalorder %s20, 1
      %p37 = por %p35, %p36
      %p38 = scmp.ne.s32.totalorder %s30, %s33
      %p39 = scmp.eq.s32.totalorder %s20, 0
      %p40 = por %p38, %p39
      %p41 = scmp.ne.s32.totalorder %s30, %s33
      %p42 = scmp.eq.s32.totalorder %s25, 1
      %p43 = por %p41, %p42
      %p44 = scmp.ne.s32.totalorder %s33, %s34
      %p45 = scmp.eq.s32.totalorder %s25, 0
      %p46 = por %p44, %p45
      %p47 = scmp.ne.s32.totalorder %s33, %s34
      %p48 = scmp.eq.s32.totalorder %s26, 1
      %p49 = por %p47, %p48
      %p51 = scmp.ne.s32.totalorder %s34, %s50
      %p52 = scmp.eq.s32.totalorder %s26, 0
      %p53 = por %p51, %p52
      %s55 = sadd.s32 %s54, 1
      %p58 = scmp.eq.s32.totalorder %s20, 1
      %p59 = scmp.ne.s32.totalorder %s54, %s56
      %p60 = scmp.eq.s32.totalorder %s20, 0
      %p61 = por %p59, %p60
      %p62 = scmp.ne.s32.totalorder %s54, %s56
      %p63 = scmp.eq.s32.totalorder %s25, 1
      %p64 = por %p62, %p63
      %p65 = scmp.ne.s32.totalorder %s56, %s57
      %p66 = scmp.eq.s32.totalorder %s25, 0
      %p67 = por %p65, %p66
      %p68 = scmp.ne.s32.totalorder %s56, %s57
      %p69 = scmp.eq.s32.totalorder %s26, 1
      %p70 = por %p68, %p69
      %p72 = scmp.ne.s32.totalorder %s57, %s71
      %p73 = scmp.eq.s32.totalorder %s26, 0
      %p74 = por %p72, %p73
      %s76 = sadd.s32 %s75, 1
      %p79 = scmp.eq.s32.totalorder %s20, 1
      %p80 = scmp.ne.s32.totalorder %s75, %s77
      %p81 = scmp.eq.s32.totalorder %s20, 0
      %p82 = por %p80, %p81
      %p83 = scmp.ne.s32.totalorder %s75, %s77
      %p84 = scmp.eq.s32.totalorder %s25, 1
      %p85 = por %p83, %p84
      %p86 = scmp.ne.s32.totalorder %s77, %s78
      %p87 = scmp.eq.s32.totalorder %s25, 0
      %p88 = por %p86, %p87
      %p89 = scmp.ne.s32.totalorder %s77, %s78
      %p90 = scmp.eq.s32.totalorder %s26, 1
      %p91 = por %p89, %p90
      %p93 = scmp.ne.s32.totalorder %s78, %s92
      %p94 = scmp.eq.s32.totalorder %s26, 0
      %p95 = por %p93, %p94
      %s97 = sadd.s32 %s96, 1
      %p100 = scmp.eq.s32.totalorder %s20, 1
      %p101 = scmp.ne.s32.totalorder %s96, %s98
      %p102 = scmp.eq.s32.totalorder %s20, 0
      %p103 = por %p101, %p102
      %p104 = scmp.ne.s32.totalorder %s96, %s98
      %p105 = scmp.eq.s32.totalorder %s25, 1
      %p106 = por %p104, %p105
      %p107 = scmp.ne.s32.totalorder %s98, %s99
      %p108 = scmp.eq.s32.totalorder %s25, 0
      %p109 = por %p107, %p108
      %p110 = scmp.ne.s32.totalorder %s98, %s99
      %p111 = scmp.eq.s32.totalorder %s26, 1
      %p112 = por %p110, %p111
      %p114 = scmp.ne.s32.totalorder %s99, %s113
      %p115 = scmp.eq.s32.totalorder %s26, 0
      %p116 = por %p114, %p115
      %s118 = sadd.s32 %s117, 1
      %p121 = scmp.eq.s32.totalorder %s20, 1
      %p122 = scmp.ne.s32.totalorder %s117, %s119
      %p123 = scmp.eq.s32.totalorder %s20, 0
      %p124 = por %p122, %p123
      %p125 = scmp.ne.s32.totalorder %s117, %s119
      %p126 = scmp.eq.s32.totalorder %s25, 1
      %p127 = por %p125, %p126
      %p128 = scmp.ne.s32.totalorder %s119, %s120
      %p129 = scmp.eq.s32.totalorder %s25, 0
      %p130 = por %p128, %p129
      %p131 = scmp.ne.s32.totalorder %s119, %s120
      %p132 = scmp.eq.s32.totalorder %s26, 1
      %p133 = por %p131, %p132
      %p135 = scmp.ne.s32.totalorder %s120, %s134
      %p136 = scmp.eq.s32.totalorder %s26, 0
      %p137 = por %p135, %p136
      %s139 = sadd.s32 %s138, 1
      %p142 = scmp.eq.s32.totalorder %s20, 1
      %p143 = scmp.ne.s32.totalorder %s138, %s140
      %p144 = scmp.eq.s32.totalorder %s20, 0
      %p145 = por %p143, %p144
      %p146 = scmp.ne.s32.totalorder %s138, %s140
      %p147 = scmp.eq.s32.totalorder %s25, 1
      %p148 = por %p146, %p147
      %p149 = scmp.ne.s32.totalorder %s140, %s141
      %p150 = scmp.eq.s32.totalorder %s25, 0
      %p151 = por %p149, %p150
      %p152 = scmp.ne.s32.totalorder %s140, %s141
      %p153 = scmp.eq.s32.totalorder %s26, 1
      %p154 = por %p152, %p153
      %p156 = scmp.ne.s32.totalorder %s141, %s155
      %p157 = scmp.eq.s32.totalorder %s26, 0
      %p158 = por %p156, %p157
      %s160 = sadd.s32 %s159, 1
      %p163 = scmp.eq.s32.totalorder %s20, 1
      %p164 = scmp.ne.s32.totalorder %s159, %s161
      %p165 = scmp.eq.s32.totalorder %s20, 0
      %p166 = por %p164, %p165
      %p167 = scmp.ne.s32.totalorder %s159, %s161
      %p168 = scmp.eq.s32.totalorder %s25, 1
      %p169 = por %p167, %p168
      %p170 = scmp.ne.s32.totalorder %s161, %s162
      %p171 = scmp.eq.s32.totalorder %s25, 0
      %p172 = por %p170, %p171
      %p173 = scmp.ne.s32.totalorder %s161, %s162
      %p174 = scmp.eq.s32.totalorder %s26, 1
      %p175 = por %p173, %p174
      %p177 = scmp.ne.s32.totalorder %s162, %s176
      %p178 = scmp.eq.s32.totalorder %s26, 0
      %p179 = por %p177, %p178
      %s181 = sadd.s32 %s180, 1
      %p184 = scmp.eq.s32.totalorder %s20, 1
      %p185 = scmp.ne.s32.totalorder %s180, %s182
      %p186 = scmp.eq.s32.totalorder %s20, 0
      %p187 = por %p185, %p186
      %p188 = scmp.ne.s32.totalorder %s180, %s182
      %p189 = scmp.eq.s32.totalorder %s25, 1
      %p190 = por %p188, %p189
      %p191 = scmp.ne.s32.totalorder %s182, %s183
      %p192 = scmp.eq.s32.totalorder %s25, 0
      %p193 = por %p191, %p192
      %p194 = scmp.ne.s32.totalorder %s182, %s183
      %p195 = scmp.eq.s32.totalorder %s26, 1
      %p196 = por %p194, %p195
      %p198 = scmp.ne.s32.totalorder %s183, %s197
      %p199 = scmp.eq.s32.totalorder %s26, 0
      %p200 = por %p198, %p199
      %s202 = sadd.s32 %s201, 1
      %p205 = scmp.eq.s32.totalorder %s20, 1
      %p206 = scmp.ne.s32.totalorder %s201, %s203
      %p207 = scmp.eq.s32.totalorder %s20, 0
      %p208 = por %p206, %p207
      %p209 = scmp.ne.s32.totalorder %s201, %s203
      %p210 = scmp.eq.s32.totalorder %s25, 1
      %p211 = por %p209, %p210
      %p212 = scmp.ne.s32.totalorder %s203, %s204
      %p213 = scmp.eq.s32.totalorder %s25, 0
      %p214 = por %p212, %p213
      %p215 = scmp.ne.s32.totalorder %s203, %s204
      %p216 = scmp.eq.s32.totalorder %s26, 1
      %p217 = por %p215, %p216
      %p219 = scmp.ne.s32.totalorder %s204, %s218
      %p220 = scmp.eq.s32.totalorder %s26, 0
      %p221 = por %p219, %p220
      %s222 = ssub.s32 %s20, %s27
      %p223 = scmp.eq.s32.totalorder %s222, 0
      %s225 = sadd.s32 %s224, 1
      %s226 = scalar_select %p223, %s224, %s225
      %p229 = pneg %p223
      %p230 = scmp.eq.s32.totalorder %s20, 1
      %p231 = por %p229, %p230
      %p232 = scmp.ne.s32.totalorder %s224, %s227
      %p233 = scmp.eq.s32.totalorder %s20, 0
      %p234 = por %p232, %p233
      %p235 = scmp.ne.s32.totalorder %s224, %s227
      %p236 = scmp.eq.s32.totalorder %s25, 1
      %p237 = por %p235, %p236
      %p238 = scmp.ne.s32.totalorder %s227, %s228
      %p239 = scmp.eq.s32.totalorder %s25, 0
      %p240 = por %p238, %p239
      %p241 = scmp.ne.s32.totalorder %s227, %s228
      %p242 = scmp.eq.s32.totalorder %s26, 1
      %p243 = por %p241, %p242
      %p245 = scmp.ne.s32.totalorder %s228, %s244
      %p246 = scmp.eq.s32.totalorder %s26, 0
      %p247 = por %p245, %p246
      %s248 = ssub.s32 %s20, %s27
      %p249 = scmp.eq.s32.totalorder %s248, 0
      %s251 = sadd.s32 %s250, 1
      %s252 = scalar_select %p249, %s250, %s251
      %p255 = pneg %p249
      %p256 = scmp.eq.s32.totalorder %s20, 1
      %p257 = por %p255, %p256
      %p258 = scmp.ne.s32.totalorder %s250, %s253
      %p259 = scmp.eq.s32.totalorder %s20, 0
      %p260 = por %p258, %p259
      %p261 = scmp.ne.s32.totalorder %s250, %s253
      %p262 = scmp.eq.s32.totalorder %s25, 1
      %p263 = por %p261, %p262
      %p264 = scmp.ne.s32.totalorder %s253, %s254
      %p265 = scmp.eq.s32.totalorder %s25, 0
      %p266 = por %p264, %p265
      %p267 = scmp.ne.s32.totalorder %s253, %s254
      %p268 = scmp.eq.s32.totalorder %s26, 1
      %p269 = por %p267, %p268
      %p271 = scmp.ne.s32.totalorder %s254, %s270
      %p272 = scmp.eq.s32.totalorder %s26, 0
      %p273 = por %p271, %p272
      %p274 = scmp.le.s32.totalorder 1, %s20
      %p275 = scmp.lt.s32.totalorder %s20, 3
      %p276 = pnand %p274, %p275
      %p277 = pneg %p276
      // Predicated region
      $region9: #{tpu_custom_call.1} parent=5 // pred_check
        _
      $region10: #{tpu_custom_call.1} parent=5 // pred_check_branch
        %279 = sbr.rel (%p276) target = $region12
      $region11: #{tpu_custom_call.1} parent=5 // pred_region
        %s280 = ssub.s32 %s20, 1
        // Predicated region
        $region13: #{tpu_custom_call.1} parent=11 // pred_check
          %p281 = pneg %p67
        $region14: #{tpu_custom_call.1} parent=11 // pred_check_branch
          %283 = sbr.rel (%p281) target = $region16
        $region15: #{tpu_custom_call.1} parent=11 // pred_region
          _
        $region16: #{tpu_custom_call.1} parent=11 // pred_fallthru
          _
        // Predicated region
        $region17: #{tpu_custom_call.1} parent=11 // pred_check
          %p284 = pneg %p88
        $region18: #{tpu_custom_call.1} parent=11 // pred_check_branch
          %286 = sbr.rel (%p284) target = $region20
        $region19: #{tpu_custom_call.1} parent=11 // pred_region
          _
        $region20: #{tpu_custom_call.1} parent=11 // pred_fallthru
          _
        // Predicated region
        $region21: #{tpu_custom_call.1} parent=11 // pred_check
          %p287 = pneg %p109
        $region22: #{tpu_custom_call.1} parent=11 // pred_check_branch
          %289 = sbr.rel (%p287) target = $region24
        $region23: #{tpu_custom_call.1} parent=11 // pred_region
          _
        $region24: #{tpu_custom_call.1} parent=11 // pred_fallthru
          _
        // Predicated region
        $region25: #{tpu_custom_call.1} parent=11 // pred_check
          %p290 = pneg %p130
        $region26: #{tpu_custom_call.1} parent=11 // pred_check_branch
          %292 = sbr.rel (%p290) target = $region28
        $region27: #{tpu_custom_call.1} parent=11 // pred_region
          _
        $region28: #{tpu_custom_call.1} parent=11 // pred_fallthru
          _
        // Predicated region
        $region29: #{tpu_custom_call.1} parent=11 // pred_check
          %p293 = pneg %p151
        $region30: #{tpu_custom_call.1} parent=11 // pred_check_branch
          %295 = sbr.rel (%p293) target = $region32
        $region31: #{tpu_custom_call.1} parent=11 // pred_region
          _
        $region32: #{tpu_custom_call.1} parent=11 // pred_fallthru
          _
        // Predicated region
        $region33: #{tpu_custom_call.1} parent=11 // pred_check
          %p296 = pneg %p172
        $region34: #{tpu_custom_call.1} parent=11 // pred_check_branch
          %298 = sbr.rel (%p296) target = $region36
        $region35: #{tpu_custom_call.1} parent=11 // pred_region
          _
        $region36: #{tpu_custom_call.1} parent=11 // pred_fallthru
          _
        // Predicated region
        $region37: #{tpu_custom_call.1} parent=11 // pred_check
          %p299 = pneg %p193
        $region38: #{tpu_custom_call.1} parent=11 // pred_check_branch
          %301 = sbr.rel (%p299) target = $region40
        $region39: #{tpu_custom_call.1} parent=11 // pred_region
          _
        $region40: #{tpu_custom_call.1} parent=11 // pred_fallthru
          _
        // Predicated region
        $region41: #{tpu_custom_call.1} parent=11 // pred_check
          %p302 = pneg %p214
        $region42: #{tpu_custom_call.1} parent=11 // pred_check_branch
          %304 = sbr.rel (%p302) target = $region44
        $region43: #{tpu_custom_call.1} parent=11 // pred_region
          _
        $region44: #{tpu_custom_call.1} parent=11 // pred_fallthru
          _
      $region12: #{tpu_custom_call.1} parent=5 // pred_fallthru
        _
      %p305 = scmp.lt.s32.totalorder %s20, 2
      // Predicated region
      $region45: #{tpu_custom_call.1} parent=5 // pred_check
        %p306 = pneg %p305
      $region46: #{tpu_custom_call.1} parent=5 // pred_check_branch
        %308 = sbr.rel (%p306) target = $region48
      $region47: #{tpu_custom_call.1} parent=5 // pred_region
        // Predicated region
        $region49: #{tpu_custom_call.1} parent=47 // pred_check
          %p309 = pneg %p40
        $region50: #{tpu_custom_call.1} parent=47 // pred_check_branch
          %311 = sbr.rel (%p309) target = $region52
        $region51: #{tpu_custom_call.1} parent=47 // pred_region
          %p312 = scmp.lt.s32.totalorder %s20, 1
          %s313 = scalar_select %p312, %s20, 1
          %s314 = smul.addr %s313, 8
          %s315 = scalar_lea.vmem %s0, %s314
        $region52: #{tpu_custom_call.1} parent=47 // pred_fallthru
          _
      $region48: #{tpu_custom_call.1} parent=5 // pred_fallthru
        _
      %p316 = scmp.le.s32.totalorder 1, %s20
      %p317 = scmp.lt.s32.totalorder %s20, 3
      %p318 = pnand %p316, %p317
      %p319 = pneg %p318
      // Predicated region
      $region53: #{tpu_custom_call.1} parent=5 // pred_check
        _
      $region54: #{tpu_custom_call.1} parent=5 // pred_check_branch
        %321 = sbr.rel (%p318) target = $region56
      $region55: #{tpu_custom_call.1} parent=5 // pred_region
        %s322 = ssub.s32 %s20, 1
        %p323 = scmp.lt.s32.totalorder %s25, 1
        %s324 = scalar_select %p323, %s25, 1
        %s325 = smul.addr %s324, 8
        %s326 = scalar_lea.vmem %s0, %s325
        %p327 = pneg %p46
        %p328 = pneg %p43
        %p329 = pneg %p67
        %p330 = pneg %p64
        %p331 = pneg %p88
        %p332 = pneg %p85
        %p333 = pneg %p109
        %p334 = pneg %p106
        %p335 = pneg %p130
        %p336 = pneg %p127
        %p337 = pneg %p151
        %p338 = pneg %p148
        %p339 = pneg %p172
        %p340 = pneg %p169
        %p341 = pneg %p193
        %p342 = pneg %p190
        %p343 = pneg %p214
        %p344 = pneg %p211
        %p345 = pneg %p240
        %p346 = pneg %p237
        %s347 = sand.u32 %s227, 1
        %s348 = scalar_lea.sflag [#allocation3], %s347
        %s349 = sand.u32 %s227, 1
        %s350 = smul.addr %s349, 8
        %s351 = scalar_lea.vmem [#allocation2], %s350
        %p352 = pneg %p266
        %p353 = pneg %p263
        %p354 = scmp.lt.s32.totalorder %s25, 1
        %s355 = scalar_select %p354, %s25, 1
        %s356 = smul.addr %s355, 8
        %s357 = scalar_lea.vmem %s10, %s356
        %p358 = scmp.lt.s32.totalorder %s25, 1
        %s359 = scalar_select %p358, %s25, 1
        %s360 = smul.addr %s359, 8
        %s361 = scalar_lea.vmem %s0, %s360
        %p362 = scmp.lt.s32.totalorder %s25, 1
        %s363 = scalar_select %p362, %s25, 1
        %s364 = smul.addr %s363, 8
        %s365 = scalar_lea.vmem %s10, %s364
        %v366 = vld [vmem:[%s361] sm:$0xff]
        %v367 = vld [vmem:[%s1] sm:$0xff]
        %v368 = vld [vmem:[%s1 + $0x8] sm:$0xff]
        %v369 = vld [vmem:[%s1 + $0x10] sm:$0xff]
        %v370 = vld [vmem:[%s2] sm:$0x1]
        %v372 = vlaneseq
        %v373 = vshrl.u32 %v372, 7
        %v374 = vsub.s32 0, %v373
        %v375 = vrot.slane %v370, %v374
        %vm377 = vcmask 195584
        %v379 = vsel %vm377, %v366, 0
        %381 = vmatprep.subr.mxu0 0.0
        %382 = vmatpush1.msra.mxu0 %v367
        %383 = vmatprep.subr.mxu0 0.0
        %384 = vmatpush1.msra.mxu0 %v368
        %385 = vmatprep.subr.mxu0 0.0
        %386 = vmatpush1.msra.mxu0 %v369
        %387 = vmatprep.subr.mxu0 0.0
        %388 = vmatpush1.msra.mxu0 0.0
        %389 = vmatprep.subr.mxu0 0.0
        %390 = vmatpush1.msra.mxu0 0.0
        %391 = vmatprep.subr.mxu0 0.0
        %392 = vmatpush1.msra.mxu0 0.0
        %393 = vmatprep.subr.mxu0 0.0
        %394 = vmatpush1.msra.mxu0 0.0
        %395 = vmatprep.subr.mxu0 0.0
        %396 = vmatpush1.msra.mxu0 0.0
        %397 = vmatprep.subr.mxu0 0.0
        %398 = vmatpush1.msra.mxu0 0.0
        %399 = vmatprep.subr.mxu0 0.0
        %400 = vmatpush1.msra.mxu0 0.0
        %401 = vmatprep.subr.mxu0 0.0
        %402 = vmatpush1.msra.mxu0 0.0
        %403 = vmatprep.subr.mxu0 0.0
        %404 = vmatpush1.msra.mxu0 0.0
        %405 = vmatprep.subr.mxu0 0.0
        %406 = vmatpush1.msra.mxu0 0.0
        %407 = vmatprep.subr.mxu0 0.0
        %408 = vmatpush1.msra.mxu0 0.0
        %409 = vmatprep.subr.mxu0 0.0
        %410 = vmatpush1.msra.mxu0 0.0
        %411 = vmatprep.subr.mxu0 0.0
        %412 = vmatpush1.msra.mxu0 0.0
        %413 = vmatprep.subr.mxu0 0.0
        %414 = vmatpush1.msra.mxu0 0.0
        %415 = vmatprep.subr.mxu0 0.0
        %416 = vmatpush1.msra.mxu0 0.0
        %417 = vmatprep.subr.mxu0 0.0
        %418 = vmatpush1.msra.mxu0 0.0
        %419 = vmatprep.subr.mxu0 0.0
        %420 = vmatpush1.msra.mxu0 0.0
        %421 = vmatprep.subr.mxu0 0.0
        %422 = vmatpush1.msra.mxu0 0.0
        %423 = vmatprep.subr.mxu0 0.0
        %424 = vmatpush1.msra.mxu0 0.0
        %425 = vmatprep.subr.mxu0 0.0
        %426 = vmatpush1.msra.mxu0 0.0
        %427 = vmatprep.subr.mxu0 0.0
        %428 = vmatpush1.msra.mxu0 0.0
        %429 = vmatprep.subr.mxu0 0.0
        %430 = vmatpush1.msra.mxu0 0.0
        %431 = vmatprep.subr.mxu0 0.0
        %432 = vmatpush1.msra.mxu0 0.0
        %433 = vmatprep.subr.mxu0 0.0
        %434 = vmatpush1.msra.mxu0 0.0
        %435 = vmatprep.subr.mxu0 0.0
        %436 = vmatpush1.msra.mxu0 0.0
        %437 = vmatprep.subr.mxu0 0.0
        %438 = vmatpush1.msra.mxu0 0.0
        %439 = vmatprep.subr.mxu0 0.0
        %440 = vmatpush1.msra.mxu0 0.0
        %441 = vmatprep.subr.mxu0 0.0
        %442 = vmatpush1.msra.mxu0 0.0
        %443 = vmatprep.subr.mxu0 0.0
        %444 = vmatpush1.msra.mxu0 0.0
        %445 = vmatprep.mubr.f32.mxu0 0.0
        %446 = vmatmul.mubr.f32.gmra.mrb[0].mxu0 %v379
        %v447 = vpop.f32.mrb[0].mxu0
        %v448 = vadd.f32 %v375, %v447
        %v449 = vpop.f32.mrb[0].mxu0
        %450 = vdwg.mxu0
        %v451 = vlaneseq
        %v452 = vand.u32 %v451, 127
        %vm453 = vcmp.lt.s32.totalorder %v452, 32
        %v454 = vmax.f32 %v448, 0.0
        %v455 = vsel %vm453, %v454, %v448
        %v456 = vld [vmem:[%s3] sm:$0xff]
        %v457 = vld [vmem:[%s3 + $0x8] sm:$0xff]
        %v458 = vld [vmem:[%s3 + $0x10] sm:$0xff]
        %v459 = vld [vmem:[%s3 + $0x18] sm:$0xff]
        %v460 = vld [vmem:[%s3 + $0x20] sm:$0xff]
        %v461 = vld [vmem:[%s3 + $0x28] sm:$0xff]
        %v462 = vld [vmem:[%s3 + $0x30] sm:$0xff]
        %v463 = vld [vmem:[%s3 + $0x38] sm:$0xff]
        %v464 = vld [vmem:[%s3 + $0x40] sm:$0xff]
        %v465 = vld [vmem:[%s3 + $0x48] sm:$0xff]
        %v466 = vld [vmem:[%s3 + $0x50] sm:$0xff]
        %v467 = vld [vmem:[%s3 + $0x58] sm:$0xff]
        %v468 = vld [vmem:[%s3 + $0x60] sm:$0xff]
        %v469 = vld [vmem:[%s3 + $0x68] sm:$0xff]
        %v470 = vld [vmem:[%s3 + $0x70] sm:$0xff]
        %v471 = vld [vmem:[%s3 + $0x78] sm:$0xff]
        %472 = vmatprep.subr.mxu0 0.0
        %473 = vmatpush1.msra.mxu0 %v456
        %474 = vmatprep.subr.mxu0 0.0
        %475 = vmatpush1.msra.mxu0 %v457
        %476 = vmatprep.subr.mxu0 0.0
        %477 = vmatpush1.msra.mxu0 %v458
        %478 = vmatprep.subr.mxu0 0.0
        %479 = vmatpush1.msra.mxu0 %v459
        %480 = vmatprep.subr.mxu0 0.0
        %481 = vmatpush1.msra.mxu0 %v460
        %482 = vmatprep.subr.mxu0 0.0
        %483 = vmatpush1.msra.mxu0 %v461
        %484 = vmatprep.subr.mxu0 0.0
        %485 = vmatpush1.msra.mxu0 %v462
        %486 = vmatprep.subr.mxu0 0.0
        %487 = vmatpush1.msra.mxu0 %v463
        %488 = vmatprep.subr.mxu0 0.0
        %489 = vmatpush1.msra.mxu0 %v464
        %490 = vmatprep.subr.mxu0 0.0
        %491 = vmatpush1.msra.mxu0 %v465
        %492 = vmatprep.subr.mxu0 0.0
        %493 = vmatpush1.msra.mxu0 %v466
        %494 = vmatprep.subr.mxu0 0.0
        %495 = vmatpush1.msra.mxu0 %v467
        %496 = vmatprep.subr.mxu0 0.0
        %497 = vmatpush1.msra.mxu0 %v468
        %498 = vmatprep.subr.mxu0 0.0
        %499 = vmatpush1.msra.mxu0 %v469
        %500 = vmatprep.subr.mxu0 0.0
        %501 = vmatpush1.msra.mxu0 %v470
        %502 = vmatprep.subr.mxu0 0.0
        %503 = vmatpush1.msra.mxu0 %v471
        %504 = vmatprep.subr.mxu0 0.0
        %505 = vmatpush1.msra.mxu0 0.0
        %506 = vmatprep.subr.mxu0 0.0
        %507 = vmatpush1.msra.mxu0 0.0
        %508 = vmatprep.subr.mxu0 0.0
        %509 = vmatpush1.msra.mxu0 0.0
        %510 = vmatprep.subr.mxu0 0.0
        %511 = vmatpush1.msra.mxu0 0.0
        %512 = vmatprep.subr.mxu0 0.0
        %513 = vmatpush1.msra.mxu0 0.0
        %514 = vmatprep.subr.mxu0 0.0
        %515 = vmatpush1.msra.mxu0 0.0
        %516 = vmatprep.subr.mxu0 0.0
        %517 = vmatpush1.msra.mxu0 0.0
        %518 = vmatprep.subr.mxu0 0.0
        %519 = vmatpush1.msra.mxu0 0.0
        %520 = vmatprep.subr.mxu0 0.0
        %521 = vmatpush1.msra.mxu0 0.0
        %522 = vmatprep.subr.mxu0 0.0
        %523 = vmatpush1.msra.mxu0 0.0
        %524 = vmatprep.subr.mxu0 0.0
        %525 = vmatpush1.msra.mxu0 0.0
        %526 = vmatprep.subr.mxu0 0.0
        %527 = vmatpush1.msra.mxu0 0.0
        %528 = vmatprep.subr.mxu0 0.0
        %529 = vmatpush1.msra.mxu0 0.0
        %530 = vmatprep.subr.mxu0 0.0
        %531 = vmatpush1.msra.mxu0 0.0
        %532 = vmatprep.subr.mxu0 0.0
        %533 = vmatpush1.msra.mxu0 0.0
        %534 = vmatprep.subr.mxu0 0.0
        %535 = vmatpush1.msra.mxu0 0.0
        %536 = vmatprep.mubr.f32.mxu0 0.0
        %537 = vmatmul.mubr.f32.gmra.mrb[0].mxu0 %v455
        %v538 = vpop.f32.mrb[0].mxu0
        %v539 = vadd.f32 0.0, %v538
        %v540 = vpop.f32.mrb[0].mxu0
        %541 = vdwg.mxu0
        %v542 = vmax.f32 %v539, 0.0
        %v543 = vsel %vm453, %v542, %v539
        %v544 = vld [vmem:[%s4] sm:$0xff]
        %v545 = vld [vmem:[%s4 + $0x8] sm:$0xff]
        %v546 = vld [vmem:[%s4 + $0x10] sm:$0xff]
        %v547 = vld [vmem:[%s4 + $0x18] sm:$0xff]
        %v548 = vld [vmem:[%s4 + $0x20] sm:$0xff]
        %v549 = vld [vmem:[%s4 + $0x28] sm:$0xff]
        %v550 = vld [vmem:[%s4 + $0x30] sm:$0xff]
        %v551 = vld [vmem:[%s4 + $0x38] sm:$0xff]
        %v552 = vld [vmem:[%s5] sm:$0x1]
        %v554 = vlaneseq
        %v555 = vshrl.u32 %v554, 7
        %v556 = vsub.s32 0, %v555
        %v557 = vrot.slane %v552, %v556
        %vm559 = vcmask 523264
        %v561 = vsel %vm559, %v543, 0
        %563 = vmatprep.subr.mxu0 0.0
        %564 = vmatpush1.msra.mxu0 %v544
        %565 = vmatprep.subr.mxu0 0.0
        %566 = vmatpush1.msra.mxu0 %v545
        %567 = vmatprep.subr.mxu0 0.0
        %568 = vmatpush1.msra.mxu0 %v546
        %569 = vmatprep.subr.mxu0 0.0
        %570 = vmatpush1.msra.mxu0 %v547
        %571 = vmatprep.subr.mxu0 0.0
        %572 = vmatpush1.msra.mxu0 %v548
        %573 = vmatprep.subr.mxu0 0.0
        %574 = vmatpush1.msra.mxu0 %v549
        %575 = vmatprep.subr.mxu0 0.0
        %576 = vmatpush1.msra.mxu0 %v550
        %577 = vmatprep.subr.mxu0 0.0
        %578 = vmatpush1.msra.mxu0 %v551
        %579 = vmatprep.subr.mxu0 0.0
        %580 = vmatpush1.msra.mxu0 0.0
        %581 = vmatprep.subr.mxu0 0.0
        %582 = vmatpush1.msra.mxu0 0.0
        %583 = vmatprep.subr.mxu0 0.0
        %584 = vmatpush1.msra.mxu0 0.0
        %585 = vmatprep.subr.mxu0 0.0
        %586 = vmatpush1.msra.mxu0 0.0
        %587 = vmatprep.subr.mxu0 0.0
        %588 = vmatpush1.msra.mxu0 0.0
        %589 = vmatprep.subr.mxu0 0.0
        %590 = vmatpush1.msra.mxu0 0.0
        %591 = vmatprep.subr.mxu0 0.0
        %592 = vmatpush1.msra.mxu0 0.0
        %593 = vmatprep.subr.mxu0 0.0
        %594 = vmatpush1.msra.mxu0 0.0
        %595 = vmatprep.subr.mxu0 0.0
        %596 = vmatpush1.msra.mxu0 0.0
        %597 = vmatprep.subr.mxu0 0.0
        %598 = vmatpush1.msra.mxu0 0.0
        %599 = vmatprep.subr.mxu0 0.0
        %600 = vmatpush1.msra.mxu0 0.0
        %601 = vmatprep.subr.mxu0 0.0
        %602 = vmatpush1.msra.mxu0 0.0
        %603 = vmatprep.subr.mxu0 0.0
        %604 = vmatpush1.msra.mxu0 0.0
        %605 = vmatprep.subr.mxu0 0.0
        %606 = vmatpush1.msra.mxu0 0.0
        %607 = vmatprep.subr.mxu0 0.0
        %608 = vmatpush1.msra.mxu0 0.0
        %609 = vmatprep.subr.mxu0 0.0
        %610 = vmatpush1.msra.mxu0 0.0
        %611 = vmatprep.subr.mxu0 0.0
        %612 = vmatpush1.msra.mxu0 0.0
        %613 = vmatprep.subr.mxu0 0.0
        %614 = vmatpush1.msra.mxu0 0.0
        %615 = vmatprep.subr.mxu0 0.0
        %616 = vmatpush1.msra.mxu0 0.0
        %617 = vmatprep.subr.mxu0 0.0
        %618 = vmatpush1.msra.mxu0 0.0
        %619 = vmatprep.subr.mxu0 0.0
        %620 = vmatpush1.msra.mxu0 0.0
        %621 = vmatprep.subr.mxu0 0.0
        %622 = vmatpush1.msra.mxu0 0.0
        %623 = vmatprep.subr.mxu0 0.0
        %624 = vmatpush1.msra.mxu0 0.0
        %625 = vmatprep.subr.mxu0 0.0
        %626 = vmatpush1.msra.mxu0 0.0
        %627 = vmatprep.mubr.f32.mxu0 0.0
        %628 = vmatmul.mubr.f32.gmra.mrb[0].mxu0 %v561
        %v629 = vpop.f32.mrb[0].mxu0
        %v630 = vadd.f32 %v557, %v629
        %v631 = vpop.f32.mrb[0].mxu0
        %632 = vdwg.mxu0
        %vm633 = vcmask 261120
        %634 = vst.msk [vmem:[%s351] sm:$0xff] %vm633, %v630
        %v635 = vld [vmem:[%s6] sm:$0xff]
        %v636 = vld [vmem:[%s6 + $0x8] sm:$0xff]
        %v637 = vld [vmem:[%s6 + $0x10] sm:$0xff]
        %v638 = vld [vmem:[%s6 + $0x18] sm:$0xff]
        %v639 = vld [vmem:[%s6 + $0x20] sm:$0xff]
        %v640 = vld [vmem:[%s6 + $0x28] sm:$0xff]
        %v641 = vld [vmem:[%s6 + $0x30] sm:$0xff]
        %v642 = vld [vmem:[%s6 + $0x38] sm:$0xff]
        %643 = vmatprep.subr.mxu0 0.0
        %644 = vmatpush1.msra.mxu0 %v635
        %645 = vmatprep.subr.mxu0 0.0
        %646 = vmatpush1.msra.mxu0 %v636
        %647 = vmatprep.subr.mxu0 0.0
        %648 = vmatpush1.msra.mxu0 %v637
        %649 = vmatprep.subr.mxu0 0.0
        %650 = vmatpush1.msra.mxu0 %v638
        %651 = vmatprep.subr.mxu0 0.0
        %652 = vmatpush1.msra.mxu0 %v639
        %653 = vmatprep.subr.mxu0 0.0
        %654 = vmatpush1.msra.mxu0 %v640
        %655 = vmatprep.subr.mxu0 0.0
        %656 = vmatpush1.msra.mxu0 %v641
        %657 = vmatprep.subr.mxu0 0.0
        %658 = vmatpush1.msra.mxu0 %v642
        %659 = vmatprep.subr.mxu0 0.0
        %660 = vmatpush1.msra.mxu0 0.0
        %661 = vmatprep.subr.mxu0 0.0
        %662 = vmatpush1.msra.mxu0 0.0
        %663 = vmatprep.subr.mxu0 0.0
        %664 = vmatpush1.msra.mxu0 0.0
        %665 = vmatprep.subr.mxu0 0.0
        %666 = vmatpush1.msra.mxu0 0.0
        %667 = vmatprep.subr.mxu0 0.0
        %668 = vmatpush1.msra.mxu0 0.0
        %669 = vmatprep.subr.mxu0 0.0
        %670 = vmatpush1.msra.mxu0 0.0
        %671 = vmatprep.subr.mxu0 0.0
        %672 = vmatpush1.msra.mxu0 0.0
        %673 = vmatprep.subr.mxu0 0.0
        %674 = vmatpush1.msra.mxu0 0.0
        %675 = vmatprep.subr.mxu0 0.0
        %676 = vmatpush1.msra.mxu0 0.0
        %677 = vmatprep.subr.mxu0 0.0
        %678 = vmatpush1.msra.mxu0 0.0
        %679 = vmatprep.subr.mxu0 0.0
        %680 = vmatpush1.msra.mxu0 0.0
        %681 = vmatprep.subr.mxu0 0.0
        %682 = vmatpush1.msra.mxu0 0.0
        %683 = vmatprep.subr.mxu0 0.0
        %684 = vmatpush1.msra.mxu0 0.0
        %685 = vmatprep.subr.mxu0 0.0
        %686 = vmatpush1.msra.mxu0 0.0
        %687 = vmatprep.subr.mxu0 0.0
        %688 = vmatpush1.msra.mxu0 0.0
        %689 = vmatprep.subr.mxu0 0.0
        %690 = vmatpush1.msra.mxu0 0.0
        %691 = vmatprep.subr.mxu0 0.0
        %692 = vmatpush1.msra.mxu0 0.0
        %693 = vmatprep.subr.mxu0 0.0
        %694 = vmatpush1.msra.mxu0 0.0
        %695 = vmatprep.subr.mxu0 0.0
        %696 = vmatpush1.msra.mxu0 0.0
        %697 = vmatprep.subr.mxu0 0.0
        %698 = vmatpush1.msra.mxu0 0.0
        %699 = vmatprep.subr.mxu0 0.0
        %700 = vmatpush1.msra.mxu0 0.0
        %701 = vmatprep.subr.mxu0 0.0
        %702 = vmatpush1.msra.mxu0 0.0
        %703 = vmatprep.subr.mxu0 0.0
        %704 = vmatpush1.msra.mxu0 0.0
        %705 = vmatprep.subr.mxu0 0.0
        %706 = vmatpush1.msra.mxu0 0.0
        %707 = vmatprep.mubr.f32.mxu0 0.0
        %708 = vmatmul.mubr.f32.gmra.mrb[0].mxu0 %v561
        %v709 = vpop.f32.mrb[0].mxu0
        %v710 = vadd.f32 0.0, %v709
        %v711 = vpop.f32.mrb[0].mxu0
        %712 = vdwg.mxu0
        %v713 = vmax.f32 %v710, 0.0
        %v714 = vld [vmem:[%s7] sm:$0xff]
        %v715 = vld [vmem:[%s7 + $0x8] sm:$0xff]
        %v716 = vld [vmem:[%s7 + $0x10] sm:$0xff]
        %v717 = vld [vmem:[%s7 + $0x18] sm:$0xff]
        %v718 = vld [vmem:[%s8] sm:$0x1]
        %v720 = vlaneseq
        %v721 = vshrl.u32 %v720, 7
        %v722 = vsub.s32 0, %v721
        %v723 = vrot.slane %v718, %v722
        %v726 = vsel %vm633, %v713, 0
        %728 = vmatprep.subr.mxu0 0.0
        %729 = vmatpush1.msra.mxu0 %v714
        %730 = vmatprep.subr.mxu0 0.0
        %731 = vmatpush1.msra.mxu0 %v715
        %732 = vmatprep.subr.mxu0 0.0
        %733 = vmatpush1.msra.mxu0 %v716
        %734 = vmatprep.subr.mxu0 0.0
        %735 = vmatpush1.msra.mxu0 %v717
        %736 = vmatprep.subr.mxu0 0.0
        %737 = vmatpush1.msra.mxu0 0.0
        %738 = vmatprep.subr.mxu0 0.0
        %739 = vmatpush1.msra.mxu0 0.0
        %740 = vmatprep.subr.mxu0 0.0
        %741 = vmatpush1.msra.mxu0 0.0
        %742 = vmatprep.subr.mxu0 0.0
        %743 = vmatpush1.msra.mxu0 0.0
        %744 = vmatprep.subr.mxu0 0.0
        %745 = vmatpush1.msra.mxu0 0.0
        %746 = vmatprep.subr.mxu0 0.0
        %747 = vmatpush1.msra.mxu0 0.0
        %748 = vmatprep.subr.mxu0 0.0
        %749 = vmatpush1.msra.mxu0 0.0
        %750 = vmatprep.subr.mxu0 0.0
        %751 = vmatpush1.msra.mxu0 0.0
        %752 = vmatprep.subr.mxu0 0.0
        %753 = vmatpush1.msra.mxu0 0.0
        %754 = vmatprep.subr.mxu0 0.0
        %755 = vmatpush1.msra.mxu0 0.0
        %756 = vmatprep.subr.mxu0 0.0
        %757 = vmatpush1.msra.mxu0 0.0
        %758 = vmatprep.subr.mxu0 0.0
        %759 = vmatpush1.msra.mxu0 0.0
        %760 = vmatprep.subr.mxu0 0.0
        %761 = vmatpush1.msra.mxu0 0.0
        %762 = vmatprep.subr.mxu0 0.0
        %763 = vmatpush1.msra.mxu0 0.0
        %764 = vmatprep.subr.mxu0 0.0
        %765 = vmatpush1.msra.mxu0 0.0
        %766 = vmatprep.subr.mxu0 0.0
        %767 = vmatpush1.msra.mxu0 0.0
        %768 = vmatprep.subr.mxu0 0.0
        %769 = vmatpush1.msra.mxu0 0.0
        %770 = vmatprep.subr.mxu0 0.0
        %771 = vmatpush1.msra.mxu0 0.0
        %772 = vmatprep.subr.mxu0 0.0
        %773 = vmatpush1.msra.mxu0 0.0
        %774 = vmatprep.subr.mxu0 0.0
        %775 = vmatpush1.msra.mxu0 0.0
        %776 = vmatprep.subr.mxu0 0.0
        %777 = vmatpush1.msra.mxu0 0.0
        %778 = vmatprep.subr.mxu0 0.0
        %779 = vmatpush1.msra.mxu0 0.0
        %780 = vmatprep.subr.mxu0 0.0
        %781 = vmatpush1.msra.mxu0 0.0
        %782 = vmatprep.subr.mxu0 0.0
        %783 = vmatpush1.msra.mxu0 0.0
        %784 = vmatprep.subr.mxu0 0.0
        %785 = vmatpush1.msra.mxu0 0.0
        %786 = vmatprep.subr.mxu0 0.0
        %787 = vmatpush1.msra.mxu0 0.0
        %788 = vmatprep.subr.mxu0 0.0
        %789 = vmatpush1.msra.mxu0 0.0
        %790 = vmatprep.subr.mxu0 0.0
        %791 = vmatpush1.msra.mxu0 0.0
        %792 = vmatprep.mubr.f32.mxu0 0.0
        %793 = vmatmul.mubr.f32.gmra.mrb[0].mxu0 %v726
        %v794 = vpop.f32.mrb[0].mxu0
        %v795 = vadd.f32 %v723, %v794
        %v796 = vpop.f32.mrb[0].mxu0
        %797 = vdwg.mxu0
        %v798 = vmax.f32 %v795, 0.0
        %vm799 = vcmask 64512
        %800 = vst.msk [vmem:[%s365] sm:$0xff] %vm799, %v798
        %s801 = sand.u32 %s227, 1
        %s802 = scalar_lea.sflag [#allocation3], %s801
        %s803 = sand.u32 %s227, 1
        %s804 = smul.addr %s803, 8
        %s805 = scalar_lea.vmem [#allocation2], %s804
        %p806 = scmp.lt.s32.totalorder %s25, 1
        %s807 = scalar_select %p806, %s25, 1
        %s808 = smul.addr %s807, 8
        %s809 = scalar_lea.vmem %s10, %s808
        // Predicated region
        $region57: #{tpu_custom_call.1} parent=55 // pred_check
          %p810 = pneg %p237
        $region58: #{tpu_custom_call.1} parent=55 // pred_check_branch
          %812 = sbr.rel (%p810) target = $region60
        $region59: #{tpu_custom_call.1} parent=55 // pred_region
          %s814 = ssub.s32 128, 128
          %815 = vsyncadd %s802, %s814
          %s816 = smul.addr %s25, 128
          %s817 = scalar_lea.hbm %s9, %s816
          %s819 = sshll.u32 %s805, 4
          %s820 = int_to_ptr.vmem [resolvable:$true] %s819
          %822 = dma.vmem_to_hbm [thread:$0]  %s820, 128, %s817, %s802
        $region60: #{tpu_custom_call.1} parent=55 // pred_fallthru
          _
        // Predicated region
        $region61: #{tpu_custom_call.1} parent=55 // pred_check
          %p823 = pneg %p263
        $region62: #{tpu_custom_call.1} parent=55 // pred_check_branch
          %825 = sbr.rel (%p823) target = $region64
        $region63: #{tpu_custom_call.1} parent=55 // pred_region
          _
        $region64: #{tpu_custom_call.1} parent=55 // pred_fallthru
          _
      $region56: #{tpu_custom_call.1} parent=5 // pred_fallthru
        _
      %p826 = scmp.le.s32.totalorder 2, %s20
      // Predicated region
      $region65: #{tpu_custom_call.1} parent=5 // pred_check
        %p827 = pneg %p826
      $region66: #{tpu_custom_call.1} parent=5 // pred_check_branch
        %829 = sbr.rel (%p827) target = $region68
      $region67: #{tpu_custom_call.1} parent=5 // pred_region
        %s830 = ssub.s32 %s20, 2
        // Predicated region
        $region69: #{tpu_custom_call.1} parent=67 // pred_check
          %p831 = pneg %p243
        $region70: #{tpu_custom_call.1} parent=67 // pred_check_branch
          %833 = sbr.rel (%p831) target = $region72
        $region71: #{tpu_custom_call.1} parent=67 // pred_region
          %s834 = sand.u32 %s228, 1
          %s835 = scalar_lea.sflag [#allocation3], %s834
          %s836 = sand.u32 %s228, 1
          %s837 = smul.addr %s836, 8
          %s838 = scalar_lea.vmem [#allocation2], %s837
          %839 = dma.done %s835, 128
        $region72: #{tpu_custom_call.1} parent=67 // pred_fallthru
          _
        // Predicated region
        $region73: #{tpu_custom_call.1} parent=67 // pred_check
          %p840 = pneg %p269
        $region74: #{tpu_custom_call.1} parent=67 // pred_check_branch
          %842 = sbr.rel (%p840) target = $region76
        $region75: #{tpu_custom_call.1} parent=67 // pred_region
          %p843 = scmp.lt.s32.totalorder %s26, 1
          %s844 = scalar_select %p843, %s26, 1
          %s845 = smul.addr %s844, 8
          %s846 = scalar_lea.vmem %s10, %s845
        $region76: #{tpu_custom_call.1} parent=67 // pred_fallthru
          _
      $region68: #{tpu_custom_call.1} parent=5 // pred_fallthru
        _
    $region6: #{tpu_custom_call.1} parent=1 // loop_footer
      %s24 = sadd.s32 1, %s20
    $region7: #{tpu_custom_call.1} parent=1 // loop_footer_branch
      %19 = sbr.rel target = $region3
    $region8: #{tpu_custom_call.1} parent=1 // loop_exit
      _
    %847 = vsyncpa [#allocation3], 1
    %s848 = scalar_lea.sflag [#allocation3], 1
    %849 = vsyncpa %s848, 1

</llo_original>
